<compile_context>
chip_gen: v5e
topology: v5e:2x2
jax: 0.10.0
libtpu: 0.0.40
codegen_flags: <defaults>
</compile_context>

<pallas_src>
import functools
import math

import jax
import jax.numpy as jnp
from jax import lax
from jax.experimental import pallas as pl
from jax.experimental.pallas import tpu as pltpu


def _linear_time_kernel(x_ref, w_ref, b_ref, o_ref, *, kt):
    """One (batch, row-tile) grid step.

    x_ref: (1, C_in, tL)       flattened rows*W slab; lanes = row-major (h, w) positions
    w_ref: (Kt, C_out, C_in)   per-tap weights (resident, constant index_map)
    b_ref: (C_out, 1)          bias (resident)
    o_ref: (1, C_out, tL)      output slab; columns >= W_out of each row are invalid
    """
    x = x_ref[0]                                   # (C_in, tL)
    tl = x.shape[-1]

    # Tap 0 plus Kt-1 accumulated matmuls.  Taps k > 0 are lane rotations of the
    # already-resident slab: pltpu.roll goes to the otherwise-idle XLU slot and only
    # one rolled copy is live at a time (vs. a materialized (Kt*C_in, tL) operand).
    # shift = tl - k  <=>  jnp.roll(x, -k): xk[:, p] = x[:, p + k]; the wrapped tail
    # only pollutes columns >= W - k >= W_out, i.e. invalid conv outputs.
    acc = jnp.dot(w_ref[0], x, preferred_element_type=jnp.float32)
    for k in range(1, kt):
        xk = pltpu.roll(x, shift=tl - k, axis=1)
        acc += jnp.dot(w_ref[k], xk, preferred_element_type=jnp.float32)

    o_ref[0] = (acc + b_ref[...]).astype(o_ref.dtype)


def _vmem_budget():
    """Per-TPU-generation (row-tile budget bytes, vmem_limit_bytes or None)."""
    try:
        cap = int(pltpu.get_tpu_info().vmem_capacity_bytes)
    except Exception:
        cap = 0
    if cap >= (100 << 20):      # v5e / v6e: 128 MiB physical VMEM per TensorCore
        return 40 << 20, 64 << 20
    if cap >= (48 << 20):       # v7x-class: 64 MiB per TensorCore -> tighter tiles
        return 20 << 20, 48 << 20
    # Unknown chip: stay inside the most conservative scoped-VMEM default (16 MiB).
    return 10 << 20, None


def _choose_rows_per_tile(B, H, W, c_in, c_out, kt, budget_bytes):
    """Rows of H per grid step: whole rows, 128-lane aligned, VMEM-budgeted, >=2 steps."""
    # Per-lane VMEM estimate (f32-conservative), fixing the under-count from review:
    #   in block  : C_in  * 4 B * 2 (double buffered)
    #   out block : C_out * 4 B * 2 (double buffered)
    #   in-kernel : x copy + one rolled tap (C_in each) + f32 acc + cast out (C_out each)
    bytes_per_lane = 4 * (4 * c_in + 4 * c_out)
    fixed = 4 * 2 * (kt * c_out * c_in + c_out) + (256 << 10)   # resident w/b + slack
    budget_lanes = max(W, (budget_bytes - fixed) // bytes_per_lane)

    # Tiles must cover whole rows (tL = th*W) so the in-kernel lane rotations only
    # wrap into invalid output columns, and the block lane dim must be a multiple
    # of 128 unless it spans the full flattened H*W axis.
    m = 128 // math.gcd(W, 128)          # tile-height granularity for lane alignment

    def aligned(h):                      # largest legal tile height <= h (0 if none)
        return (h // m) * m

    cap_th = min(H, budget_lanes // W)
    if cap_th >= H:
        # Whole per-batch slab fits the budget.
        if B >= 2:
            return H                     # batch axis alone keeps both v7x cores fed
        # B == 1: split the row axis so the grid has >= 2 (roughly even) steps for
        # v7x's two TensorCores; costs nothing on single-core v5e/v6e.
        th = aligned(min(cap_th, (H + 1) // 2))
        return th if th > 0 else H       # no legal split -> single step (tiny problem)
    th = aligned(cap_th)
    if th > 0:
        return th
    # No lane-aligned whole-row tile fits the soft budget and neither does the full
    # slab: take the smallest legal tile and lean on the raised vmem_limit_bytes.
    # TODO(synk): shapes where even `m` rows overflow VMEM would need W-tiling with
    # halo loads, which this kernel does not implement.
    return m if m <= H else H


@functools.partial(jax.jit, static_argnames=("out_dtype", "single_buffer_weights"))
def _linear_time_impl(x, weight, bias, *, out_dtype, single_buffer_weights):
    B, C_in, H, W = x.shape
    C_out, C_in_w, KH, Kt = weight.shape
    assert C_in_w == C_in and KH == 1, "weight must be (C_out, C_in, 1, Kt)"
    assert Kt <= W, "kernel width Kt must be <= W (otherwise W_out < 1)"
    W_out = W - Kt + 1
    L = H * W

    budget_bytes, vmem_limit = _vmem_budget()
    th = _choose_rows_per_tile(B, H, W, C_in, C_out, Kt, budget_bytes)
    tL = th * W
    # Whole-row tiles are what makes the lane-rotate tap trick safe; never tile W.
    assert 1 <= th <= H and tL % W == 0
    assert tL % 128 == 0 or tL == L, "block lane dim must be 128-aligned or span H*W"

    # Free layout change only: lanes carry the flattened row-major (H, W) positions.
    x3 = x.reshape(B, C_in, L)
    # Per-tap weights (Kt, C_out, C_in); no zero padding / im2col needed.
    w_taps = jnp.transpose(weight[:, :, 0, :], (2, 0, 1))
    b2 = bias.reshape(C_out, 1)

    def resident(shape):
        # Constant index_map -> DMA'd once and kept resident.  Single-buffer it so
        # the saved VMEM goes back into the activation tile (falls back below if
        # this Pallas version lacks pipeline_mode support).
        if single_buffer_weights:
            return pl.BlockSpec(shape, lambda b, j: (0,) * len(shape),
                                pipeline_mode=pl.Buffered(1))
        return pl.BlockSpec(shape, lambda b, j: (0,) * len(shape))

    grid = (B, pl.cdiv(H, th))           # == cdiv(L, tL); last row tile may be ragged
    compiler_kwargs = dict(dimension_semantics=("parallel", "parallel"))
    if vmem_limit is not None:
        compiler_kwargs["vmem_limit_bytes"] = int(vmem_limit)

    out = pl.pallas_call(
        functools.partial(_linear_time_kernel, kt=Kt),
        out_shape=jax.ShapeDtypeStruct((B, C_out, L), out_dtype),
        grid=grid,
        in_specs=[
            # Row-tile j covers whole rows [j*th, (j+1)*th) -> lanes [j*tL, (j+1)*tL).
            pl.BlockSpec((1, C_in, tL), lambda b, j: (b, 0, j)),
            resident((Kt, C_out, C_in)),
            resident((C_out, 1)),
        ],
        out_specs=pl.BlockSpec((1, C_out, tL), lambda b, j: (b, 0, j)),
        compiler_params=pltpu.CompilerParams(**compiler_kwargs),
    )(x3, w_taps, b2)

    # Free reshape back to NCHW, then drop the Kt-1 invalid columns per row.  For this
    # module family W (the temporal dim) is small, so W_out << 128 and the review's
    # full-W store path is the right one; in a real model this slice fuses into the
    # consumer, so it is not an extra HBM pass.
    # TODO(synk): for W_out >= 128 an in-kernel compact (B, C_out, H, W_out) store
    # would remove the slice entirely; it needs a lane->(sublane,lane) value reshape
    # that is only cheap when W % 128 == 0, so it is intentionally not implemented.
    return out.reshape(B, C_out, H, W)[:, :, :, :W_out]


def linear_time_forward(x, weight, bias, out_dtype=None):
    """Forward of `linear_time` (Conv2d(c_in, c_out, (1, Kt), stride 1, bias=True)).

    x: (B, C_in, H, W) NCHW float; weight: (C_out, C_in, 1, Kt) OIHW; bias: (C_out,).
    Returns (B, C_out, H, W - Kt + 1).  On bandwidth-starved chips (v5e) pass
    out_dtype=jnp.bfloat16 to halve output bytes; accumulation stays f32.
    """
    out_dtype = jnp.dtype(x.dtype if out_dtype is None else out_dtype)
    try:
        return _linear_time_impl(x, weight, bias, out_dtype=out_dtype,
                                 single_buffer_weights=True)
    except Exception:
        # Pallas versions without BlockSpec(pipeline_mode=pl.Buffered(1)) support:
        # retry with default double-buffered resident weights (a few KiB wasted).
        return _linear_time_impl(x, weight, bias, out_dtype=out_dtype,
                                 single_buffer_weights=False)


def _reference(x, weight, bias):
    y = lax.conv_general_dilated(
        x, weight,
        window_strides=(1, 1),
        padding="VALID",
        dimension_numbers=("NCHW", "OIHW", "NCHW"),
    )
    return y + bias.reshape(1, -1, 1, 1)


if __name__ == "__main__":
    def run_case(B, C_in, C_out, H, W, Kt, key):
        kx, kw, kb = jax.random.split(key, 3)
        x = jax.random.normal(kx, (B, C_in, H, W), dtype=jnp.float32)
        bound = 1.0 / ((C_in * Kt) ** 0.5)
        w = jax.random.uniform(kw, (C_out, C_in, 1, Kt), jnp.float32, -bound, bound)
        b = jax.random.uniform(kb, (C_out,), jnp.float32, -bound, bound)

        y = linear_time_forward(x, w, b)
        jax.block_until_ready(y)

        y_ref = _reference(x, w, b)
        assert y.shape == (B, C_out, H, W - Kt + 1), y.shape
        assert jnp.allclose(y, y_ref, atol=1e-5, rtol=1e-5), (
            f"mismatch vs reference conv for case {(B, C_in, C_out, H, W, Kt)}")

    k1, k2 = jax.random.split(jax.random.PRNGKey(0))
    # Small primary case (typical tiny temporal kernel of the HGCN block).
    run_case(B=2, C_in=4, C_out=8, H=16, W=8, Kt=3, key=k1)
    # B=1 + non-dividing H: exercises the >=2-grid-step split (v7x megacore) and the
    # ragged (masked) last row tile, with odd channel counts.
    run_case(B=1, C_in=3, C_out=5, H=20, W=16, Kt=4, key=k2)

    print("KERNEL_OK")
</pallas_src>

<mosaic_0001>
module attributes {stable_mosaic.version = 11 : i64} {
  func.func @_linear_time_kernel(%arg0: i32, %arg1: i32, %arg2: memref<1x4x128xf32, #tpu.memory_space<vmem>>, %arg3: memref<3x8x4xf32, #tpu.memory_space<vmem>>, %arg4: memref<8x1xf32, #tpu.memory_space<vmem>>, %arg5: memref<1x8x128xf32, #tpu.memory_space<vmem>>) attributes {dimension_semantics = [#tpu.dimension_semantics<parallel>, #tpu.dimension_semantics<parallel>], iteration_bounds = array<i64: 2, 1>, scalar_prefetch = 0 : i64, scratch_operands = 0 : i64, tpu.core_type = #tpu.core_type<tc>, window_params = [{transform_indices = @transform_0, window_bounds = array<i64: 1, 4, 128>}, {pipeline_mode = #tpu.pipeline_mode<synchronous>, transform_indices = @transform_1, window_bounds = array<i64: 3, 8, 4>}, {pipeline_mode = #tpu.pipeline_mode<synchronous>, transform_indices = @transform_2, window_bounds = array<i64: 8, 1>}, {transform_indices = @transform_3, window_bounds = array<i64: 1, 8, 128>}]} {
    %c0 = arith.constant 0 : index
    %c0_0 = arith.constant 0 : index
    %c0_1 = arith.constant 0 : index
    %0 = vector.load %arg2[%c0, %c0_0, %c0_1] : memref<1x4x128xf32, #tpu.memory_space<vmem>>, vector<1x4x128xf32>
    %1 = vector.shape_cast %0 : vector<1x4x128xf32> to vector<4x128xf32>
    %c0_2 = arith.constant 0 : index
    %c0_3 = arith.constant 0 : index
    %c0_4 = arith.constant 0 : index
    %2 = vector.load %arg3[%c0_2, %c0_3, %c0_4] : memref<3x8x4xf32, #tpu.memory_space<vmem>>, vector<1x8x4xf32>
    %3 = vector.shape_cast %2 : vector<1x8x4xf32> to vector<8x4xf32>
    %cst = arith.constant dense<0.000000e+00> : vector<8x128xf32>
    %4 = tpu.matmul %3, %1, %cst {dimension_numbers = #tpu.dot_dimension_numbers<[1], [0], [0], [1], [0, 0, 1, 1], [], []>} : vector<8x4xf32>, vector<4x128xf32>, vector<8x128xf32> -> vector<8x128xf32>
    %c127_i32 = arith.constant 127 : i32
    %5 = tpu.dynamic_rotate %1 by %c127_i32 dim 1 : vector<4x128xf32>, i32 -> vector<4x128xf32>
    %c1 = arith.constant 1 : index
    %c0_5 = arith.constant 0 : index
    %c0_6 = arith.constant 0 : index
    %6 = vector.load %arg3[%c1, %c0_5, %c0_6] : memref<3x8x4xf32, #tpu.memory_space<vmem>>, vector<1x8x4xf32>
    %7 = vector.shape_cast %6 : vector<1x8x4xf32> to vector<8x4xf32>
    %cst_7 = arith.constant dense<0.000000e+00> : vector<8x128xf32>
    %8 = tpu.matmul %7, %5, %cst_7 {dimension_numbers = #tpu.dot_dimension_numbers<[1], [0], [0], [1], [0, 0, 1, 1], [], []>} : vector<8x4xf32>, vector<4x128xf32>, vector<8x128xf32> -> vector<8x128xf32>
    %9 = arith.addf %4, %8 : vector<8x128xf32>
    %c126_i32 = arith.constant 126 : i32
    %10 = tpu.dynamic_rotate %1 by %c126_i32 dim 1 : vector<4x128xf32>, i32 -> vector<4x128xf32>
    %c2 = arith.constant 2 : index
    %c0_8 = arith.constant 0 : index
    %c0_9 = arith.constant 0 : index
    %11 = vector.load %arg3[%c2, %c0_8, %c0_9] : memref<3x8x4xf32, #tpu.memory_space<vmem>>, vector<1x8x4xf32>
    %12 = vector.shape_cast %11 : vector<1x8x4xf32> to vector<8x4xf32>
    %cst_10 = arith.constant dense<0.000000e+00> : vector<8x128xf32>
    %13 = tpu.matmul %12, %10, %cst_10 {dimension_numbers = #tpu.dot_dimension_numbers<[1], [0], [0], [1], [0, 0, 1, 1], [], []>} : vector<8x4xf32>, vector<4x128xf32>, vector<8x128xf32> -> vector<8x128xf32>
    %14 = arith.addf %9, %13 : vector<8x128xf32>
    %c0_11 = arith.constant 0 : index
    %c0_12 = arith.constant 0 : index
    %15 = vector.load %arg4[%c0_11, %c0_12] : memref<8x1xf32, #tpu.memory_space<vmem>>, vector<8x1xf32>
    %16 = vector.broadcast %15 : vector<8x1xf32> to vector<8x128xf32>
    %17 = arith.addf %14, %16 : vector<8x128xf32>
    %c0_13 = arith.constant 0 : index
    %c0_14 = arith.constant 0 : index
    %c0_15 = arith.constant 0 : index
    %18 = vector.load %arg5[%c0_13, %c0_14, %c0_15] : memref<1x8x128xf32, #tpu.memory_space<vmem>>, vector<1x8x128xf32>
    %19 = vector.shape_cast %18 : vector<1x8x128xf32> to vector<8x128xf32>
    %20 = vector.shape_cast %17 : vector<8x128xf32> to vector<1x8x128xf32>
    tpu.vector_store %arg5[%c0_13, %c0_14, %c0_15], %20 {strides = array<i32>} : memref<1x8x128xf32, #tpu.memory_space<vmem>>, vector<1x8x128xf32>,
    return
  }
  func.func @transform_0(%arg0: i32, %arg1: i32) -> (i32, i32, i32) {
    %c0_i32 = arith.constant 0 : i32
    %c0_i32_0 = arith.constant 0 : i32
    return %arg0, %c0_i32, %arg1 : i32, i32, i32
  }
  func.func @transform_1(%arg0: i32, %arg1: i32) -> (i32, i32, i32) {
    %c0_i32 = arith.constant 0 : i32
    %c0_i32_0 = arith.constant 0 : i32
    %c0_i32_1 = arith.constant 0 : i32
    %c0_i32_2 = arith.constant 0 : i32
    return %c0_i32, %c0_i32_0, %c0_i32_1 : i32, i32, i32
  }
  func.func @transform_2(%arg0: i32, %arg1: i32) -> (i32, i32) {
    %c0_i32 = arith.constant 0 : i32
    %c0_i32_0 = arith.constant 0 : i32
    %c0_i32_1 = arith.constant 0 : i32
    return %c0_i32, %c0_i32_0 : i32, i32
  }
  func.func @transform_3(%arg0: i32, %arg1: i32) -> (i32, i32, i32) {
    %c0_i32 = arith.constant 0 : i32
    %c0_i32_0 = arith.constant 0 : i32
    return %arg0, %c0_i32, %arg1 : i32, i32, i32
  }
}

module attributes {stable_mosaic.version = 11 : i64} {
  func.func @_linear_time_kernel(%arg0: i32, %arg1: i32, %arg2: memref<1x4x128xf32, #tpu.memory_space<vmem>>, %arg3: memref<3x8x4xf32, #tpu.memory_space<vmem>>, %arg4: memref<8x1xf32, #tpu.memory_space<vmem>>, %arg5: memref<1x8x128xf32, #tpu.memory_space<vmem>>) attributes {dimension_semantics = [#tpu.dimension_semantics<parallel>, #tpu.dimension_semantics<parallel>], iteration_bounds = array<i64: 2, 1>, scalar_prefetch = 0 : i64, scratch_operands = 0 : i64, tpu.core_type = #tpu.core_type<tc>, window_params = [{transform_indices = @transform_0, window_bounds = array<i64: 1, 4, 128>}, {pipeline_mode = #tpu.pipeline_mode<synchronous>, transform_indices = @transform_1, window_bounds = array<i64: 3, 8, 4>}, {pipeline_mode = #tpu.pipeline_mode<synchronous>, transform_indices = @transform_2, window_bounds = array<i64: 8, 1>}, {transform_indices = @transform_3, window_bounds = array<i64: 1, 8, 128>}]} {
    %c0 = arith.constant 0 : index
    %c0_0 = arith.constant 0 : index
    %c0_1 = arith.constant 0 : index
    %0 = vector.load %arg2[%c0, %c0_0, %c0_1] : memref<1x4x128xf32, #tpu.memory_space<vmem>>, vector<1x4x128xf32>
    %1 = vector.shape_cast %0 : vector<1x4x128xf32> to vector<4x128xf32>
    %c0_2 = arith.constant 0 : index
    %c0_3 = arith.constant 0 : index
    %c0_4 = arith.constant 0 : index
    %2 = vector.load %arg3[%c0_2, %c0_3, %c0_4] : memref<3x8x4xf32, #tpu.memory_space<vmem>>, vector<1x8x4xf32>
    %3 = vector.shape_cast %2 : vector<1x8x4xf32> to vector<8x4xf32>
    %cst = arith.constant dense<0.000000e+00> : vector<8x128xf32>
    %4 = tpu.matmul %3, %1, %cst {dimension_numbers = #tpu.dot_dimension_numbers<[1], [0], [0], [1], [0, 0, 1, 1], [], []>} : vector<8x4xf32>, vector<4x128xf32>, vector<8x128xf32> -> vector<8x128xf32>
    %c127_i32 = arith.constant 127 : i32
    %5 = tpu.dynamic_rotate %1 by %c127_i32 dim 1 : vector<4x128xf32>, i32 -> vector<4x128xf32>
    %c1 = arith.constant 1 : index
    %c0_5 = arith.constant 0 : index
    %c0_6 = arith.constant 0 : index
    %6 = vector.load %arg3[%c1, %c0_5, %c0_6] : memref<3x8x4xf32, #tpu.memory_space<vmem>>, vector<1x8x4xf32>
    %7 = vector.shape_cast %6 : vector<1x8x4xf32> to vector<8x4xf32>
    %cst_7 = arith.constant dense<0.000000e+00> : vector<8x128xf32>
    %8 = tpu.matmul %7, %5, %cst_7 {dimension_numbers = #tpu.dot_dimension_numbers<[1], [0], [0], [1], [0, 0, 1, 1], [], []>} : vector<8x4xf32>, vector<4x128xf32>, vector<8x128xf32> -> vector<8x128xf32>
    %9 = arith.addf %4, %8 : vector<8x128xf32>
    %c126_i32 = arith.constant 126 : i32
    %10 = tpu.dynamic_rotate %1 by %c126_i32 dim 1 : vector<4x128xf32>, i32 -> vector<4x128xf32>
    %c2 = arith.constant 2 : index
    %c0_8 = arith.constant 0 : index
    %c0_9 = arith.constant 0 : index
    %11 = vector.load %arg3[%c2, %c0_8, %c0_9] : memref<3x8x4xf32, #tpu.memory_space<vmem>>, vector<1x8x4xf32>
    %12 = vector.shape_cast %11 : vector<1x8x4xf32> to vector<8x4xf32>
    %cst_10 = arith.constant dense<0.000000e+00> : vector<8x128xf32>
    %13 = tpu.matmul %12, %10, %cst_10 {dimension_numbers = #tpu.dot_dimension_numbers<[1], [0], [0], [1], [0, 0, 1, 1], [], []>} : vector<8x4xf32>, vector<4x128xf32>, vector<8x128xf32> -> vector<8x128xf32>
    %14 = arith.addf %9, %13 : vector<8x128xf32>
    %c0_11 = arith.constant 0 : index
    %c0_12 = arith.constant 0 : index
    %15 = vector.load %arg4[%c0_11, %c0_12] : memref<8x1xf32, #tpu.memory_space<vmem>>, vector<8x1xf32>
    %16 = vector.broadcast %15 : vector<8x1xf32> to vector<8x128xf32>
    %17 = arith.addf %14, %16 : vector<8x128xf32>
    %c0_13 = arith.constant 0 : index
    %c0_14 = arith.constant 0 : index
    %c0_15 = arith.constant 0 : index
    %18 = vector.load %arg5[%c0_13, %c0_14, %c0_15] : memref<1x8x128xf32, #tpu.memory_space<vmem>>, vector<1x8x128xf32>
    %19 = vector.shape_cast %18 : vector<1x8x128xf32> to vector<8x128xf32>
    %20 = vector.shape_cast %17 : vector<8x128xf32> to vector<1x8x128xf32>
    tpu.vector_store %arg5[%c0_13, %c0_14, %c0_15], %20 {strides = array<i32>} : memref<1x8x128xf32, #tpu.memory_space<vmem>>, vector<1x8x128xf32>,
    return
  }
  func.func @transform_0(%arg0: i32, %arg1: i32) -> (i32, i32, i32) {
    %c0_i32 = arith.constant 0 : i32
    %c0_i32_0 = arith.constant 0 : i32
    return %arg0, %c0_i32, %arg1 : i32, i32, i32
  }
  func.func @transform_1(%arg0: i32, %arg1: i32) -> (i32, i32, i32) {
    %c0_i32 = arith.constant 0 : i32
    %c0_i32_0 = arith.constant 0 : i32
    %c0_i32_1 = arith.constant 0 : i32
    %c0_i32_2 = arith.constant 0 : i32
    return %c0_i32, %c0_i32_0, %c0_i32_1 : i32, i32, i32
  }
  func.func @transform_2(%arg0: i32, %arg1: i32) -> (i32, i32) {
    %c0_i32 = arith.constant 0 : i32
    %c0_i32_0 = arith.constant 0 : i32
    %c0_i32_1 = arith.constant 0 : i32
    return %c0_i32, %c0_i32_0 : i32, i32
  }
  func.func @transform_3(%arg0: i32, %arg1: i32) -> (i32, i32, i32) {
    %c0_i32 = arith.constant 0 : i32
    %c0_i32_0 = arith.constant 0 : i32
    return %arg0, %c0_i32, %arg1 : i32, i32, i32
  }
}

</mosaic_0001>

<llo_original>
// kernel: _linear_time_impl.1
$region0: #{_linear_time_impl.1}
  #allocation0 [shape = 'u32[]', space=smem, size = 0x4, offset = 0x4, fixed_abs, tag = 'smem constant byte address 0x4 - core index']
  #allocation1 [shape = 'u32[72,128]{1,0:T(1,128)}', space=vmem, size = 0x9000, scoped, tag = 'internal scratch']
  %s0 = inlined_call_operand.vmem [shape: f32[2,4,128], index: 0, kind: input, shape index: {}]
  %s1 = inlined_call_operand.vmem [shape: f32[3,8,4], index: 1, kind: input, shape index: {}]
  %s2 = inlined_call_operand.vmem [shape: f32[8,1], index: 2, kind: input, shape index: {}]
  %s3 = inlined_call_operand.vmem [shape: f32[2,8,128], index: 3, kind: output, shape index: {}]
  %s4 = sld [smem:[#allocation0]]
  $region45: #{_linear_time_impl.1} parent=0
    _
  %s6 = ssub.s32 1, %s4
  %s7 = scalar_select 0, %s6, %s4
  loop: start=0, step=1, limit=4
  $region2: #{_linear_time_impl.1} parent=0 // loop_pre_header
    _
  $region3: #{_linear_time_impl.1} parent=0 // loop_header
    %s9 = sphi 0, %s13
    %p10 = scmp.ge.s32.totalorder %s9, 4
    %s16 = sphi 0, %s28
    %s17 = sphi 0, %s24
    %s18 = sphi 0, %s16
    %s19 = sphi 0, %s17
    %s20 = sphi 0, %s18
    %s21 = sphi 0, %s19
    %s33 = sphi 0, %s35
    %s36 = sphi 0, %s33
    %s37 = sphi 0, %s36
    %s53 = sphi 0, %s37
    %s57 = sphi 0, %s57
    %s59 = sphi 0, %s57
    %s60 = sphi 0, %s59
    %s74 = sphi 0, %s60
    %s78 = sphi 0, %s78
    %s80 = sphi 0, %s78
    %s81 = sphi 0, %s80
    %s95 = sphi 0, %s81
    %s103 = sphi 0, %s105
    %s106 = sphi 0, %s103
    %s107 = sphi 0, %s106
    %s123 = sphi 0, %s107
  $region4: #{_linear_time_impl.1} parent=0 // loop_header_branch
    %12 = sbr.rel (%p10) target = $region8
  $region5: #{_linear_time_impl.1} parent=0 // loop_body
    %s14 = ssub.s32 %s9, 1
    %s15 = ssub.s32 %s9, 2
    %s22 = sadd.s32 1, %s17
    %p23 = scmp.ge.s32.totalorder %s22, 1
    %s24 = scalar_select %p23, 0, %s22
    %s25 = sadd.s32 1, %s16
    %s26 = scalar_select %p23, %s25, %s16
    %p27 = scmp.ge.s32.totalorder %s26, 2
    %s28 = scalar_select %p27, 0, %s26
    %s29 = ssub.s32 %s16, %s28
    %s30 = ssub.s32 %s17, %s24
    %s31 = sor.u32 %s29, %s30
    %p32 = scmp.eq.s32.totalorder %s31, 0
    %s34 = sadd.s32 %s33, 1
    %s35 = scalar_select %p32, %s33, %s34
    %p38 = pneg %p32
    %p39 = scmp.eq.s32.totalorder %s9, 1
    %p40 = por %p38, %p39
    %p41 = scmp.ne.s32.totalorder %s33, %s36
    %p42 = scmp.eq.s32.totalorder %s9, 0
    %p43 = por %p41, %p42
    %p44 = scmp.ne.s32.totalorder %s33, %s36
    %p45 = scmp.eq.s32.totalorder %s14, 1
    %p46 = por %p44, %p45
    %p47 = scmp.ne.s32.totalorder %s36, %s37
    %p48 = scmp.eq.s32.totalorder %s14, 0
    %p49 = por %p47, %p48
    %p50 = scmp.ne.s32.totalorder %s36, %s37
    %p51 = scmp.eq.s32.totalorder %s15, 1
    %p52 = por %p50, %p51
    %p54 = scmp.ne.s32.totalorder %s37, %s53
    %p55 = scmp.eq.s32.totalorder %s15, 0
    %p56 = por %p54, %p55
    %s58 = sadd.s32 %s57, 1
    %p61 = scmp.eq.s32.totalorder %s9, 1
    %p62 = scmp.ne.s32.totalorder %s57, %s59
    %p63 = scmp.eq.s32.totalorder %s9, 0
    %p64 = por %p62, %p63
    %p65 = scmp.ne.s32.totalorder %s57, %s59
    %p66 = scmp.eq.s32.totalorder %s14, 1
    %p67 = por %p65, %p66
    %p68 = scmp.ne.s32.totalorder %s59, %s60
    %p69 = scmp.eq.s32.totalorder %s14, 0
    %p70 = por %p68, %p69
    %p71 = scmp.ne.s32.totalorder %s59, %s60
    %p72 = scmp.eq.s32.totalorder %s15, 1
    %p73 = por %p71, %p72
    %p75 = scmp.ne.s32.totalorder %s60, %s74
    %p76 = scmp.eq.s32.totalorder %s15, 0
    %p77 = por %p75, %p76
    %s79 = sadd.s32 %s78, 1
    %p82 = scmp.eq.s32.totalorder %s9, 1
    %p83 = scmp.ne.s32.totalorder %s78, %s80
    %p84 = scmp.eq.s32.totalorder %s9, 0
    %p85 = por %p83, %p84
    %p86 = scmp.ne.s32.totalorder %s78, %s80
    %p87 = scmp.eq.s32.totalorder %s14, 1
    %p88 = por %p86, %p87
    %p89 = scmp.ne.s32.totalorder %s80, %s81
    %p90 = scmp.eq.s32.totalorder %s14, 0
    %p91 = por %p89, %p90
    %p92 = scmp.ne.s32.totalorder %s80, %s81
    %p93 = scmp.eq.s32.totalorder %s15, 1
    %p94 = por %p92, %p93
    %p96 = scmp.ne.s32.totalorder %s81, %s95
    %p97 = scmp.eq.s32.totalorder %s15, 0
    %p98 = por %p96, %p97
    %s99 = ssub.s32 %s16, %s28
    %s100 = ssub.s32 %s17, %s24
    %s101 = sor.u32 %s99, %s100
    %p102 = scmp.eq.s32.totalorder %s101, 0
    %s104 = sadd.s32 %s103, 1
    %s105 = scalar_select %p102, %s103, %s104
    %p108 = pneg %p102
    %p109 = scmp.eq.s32.totalorder %s9, 1
    %p110 = por %p108, %p109
    %p111 = scmp.ne.s32.totalorder %s103, %s106
    %p112 = scmp.eq.s32.totalorder %s9, 0
    %p113 = por %p111, %p112
    %p114 = scmp.ne.s32.totalorder %s103, %s106
    %p115 = scmp.eq.s32.totalorder %s14, 1
    %p116 = por %p114, %p115
    %p117 = scmp.ne.s32.totalorder %s106, %s107
    %p118 = scmp.eq.s32.totalorder %s14, 0
    %p119 = por %p117, %p118
    %p120 = scmp.ne.s32.totalorder %s106, %s107
    %p121 = scmp.eq.s32.totalorder %s15, 1
    %p122 = por %p120, %p121
    %p124 = scmp.ne.s32.totalorder %s107, %s123
    %p125 = scmp.eq.s32.totalorder %s15, 0
    %p126 = por %p124, %p125
    %p127 = scmp.le.s32.totalorder 1, %s9
    %p128 = scmp.lt.s32.totalorder %s9, 3
    %p129 = pnand %p127, %p128
    %p130 = pneg %p129
    // Predicated region
    $region9: #{_linear_time_impl.1} parent=5 // pred_check
      _
    $region10: #{_linear_time_impl.1} parent=5 // pred_check_branch
      %132 = sbr.rel (%p129) target = $region12
    $region11: #{_linear_time_impl.1} parent=5 // pred_region
      %s133 = ssub.s32 %s9, 1
      // Predicated region
      $region13: #{_linear_time_impl.1} parent=11 // pred_check
        %p134 = pneg %p70
      $region14: #{_linear_time_impl.1} parent=11 // pred_check_branch
        %136 = sbr.rel (%p134) target = $region16
      $region15: #{_linear_time_impl.1} parent=11 // pred_region
        _
      $region16: #{_linear_time_impl.1} parent=11 // pred_fallthru
        _
      // Predicated region
      $region17: #{_linear_time_impl.1} parent=11 // pred_check
        %p137 = pneg %p91
      $region18: #{_linear_time_impl.1} parent=11 // pred_check_branch
        %139 = sbr.rel (%p137) target = $region20
      $region19: #{_linear_time_impl.1} parent=11 // pred_region
        _
      $region20: #{_linear_time_impl.1} parent=11 // pred_fallthru
        _
    $region12: #{_linear_time_impl.1} parent=5 // pred_fallthru
      _
    %p140 = scmp.lt.s32.totalorder %s9, 2
    // Predicated region
    $region21: #{_linear_time_impl.1} parent=5 // pred_check
      %p141 = pneg %p140
    $region22: #{_linear_time_impl.1} parent=5 // pred_check_branch
      %143 = sbr.rel (%p141) target = $region24
    $region23: #{_linear_time_impl.1} parent=5 // pred_region
      // Predicated region
      $region25: #{_linear_time_impl.1} parent=23 // pred_check
        %p144 = pneg %p43
      $region26: #{_linear_time_impl.1} parent=23 // pred_check_branch
        %146 = sbr.rel (%p144) target = $region28
      $region27: #{_linear_time_impl.1} parent=23 // pred_region
        %p147 = scmp.lt.s32.totalorder %s16, 1
        %s148 = scalar_select %p147, %s16, 1
        %p149 = scmp.lt.s32.totalorder %s17, 0
        %s150 = scalar_select %p149, %s17, 0
        %s151 = sadd.s32 %s150, %s148
        %s152 = smul.addr %s151, 4
        %s153 = scalar_lea.vmem %s0, %s152
      $region28: #{_linear_time_impl.1} parent=23 // pred_fallthru
        _
    $region24: #{_linear_time_impl.1} parent=5 // pred_fallthru
      _
    %p154 = scmp.le.s32.totalorder 1, %s9
    %p155 = scmp.lt.s32.totalorder %s9, 3
    %p156 = pnand %p154, %p155
    %p157 = pneg %p156
    // Predicated region
    $region29: #{_linear_time_impl.1} parent=5 // pred_check
      _
    $region30: #{_linear_time_impl.1} parent=5 // pred_check_branch
      %159 = sbr.rel (%p156) target = $region32
    $region31: #{_linear_time_impl.1} parent=5 // pred_region
      %s160 = ssub.s32 %s9, 1
      %p161 = scmp.lt.s32.totalorder %s18, 1
      %s162 = scalar_select %p161, %s18, 1
      %p163 = scmp.lt.s32.totalorder %s19, 0
      %s164 = scalar_select %p163, %s19, 0
      %s165 = sadd.s32 %s164, %s162
      %s166 = smul.addr %s165, 4
      %s167 = scalar_lea.vmem %s0, %s166
      %p168 = pneg %p49
      %p169 = pneg %p46
      %p170 = pneg %p70
      %p171 = pneg %p67
      %p172 = pneg %p91
      %p173 = pneg %p88
      %p174 = pneg %p119
      %p175 = pneg %p116
      %p176 = scmp.lt.s32.totalorder %s18, 1
      %s177 = scalar_select %p176, %s18, 1
      %p178 = scmp.lt.s32.totalorder %s19, 0
      %s179 = scalar_select %p178, %s19, 0
      %s180 = sadd.s32 %s179, %s177
      %s181 = smul.addr %s180, 8
      %s182 = scalar_lea.vmem %s3, %s181
      %p183 = scmp.lt.s32.totalorder %s18, 1
      %s184 = scalar_select %p183, %s18, 1
      %p185 = scmp.lt.s32.totalorder %s19, 0
      %s186 = scalar_select %p185, %s19, 0
      %s187 = sadd.s32 %s186, %s184
      %s188 = smul.addr %s187, 4
      %s189 = scalar_lea.vmem %s0, %s188
      %p190 = scmp.lt.s32.totalorder %s18, 1
      %s191 = scalar_select %p190, %s18, 1
      %p192 = scmp.lt.s32.totalorder %s19, 0
      %s193 = scalar_select %p192, %s19, 0
      %s194 = sadd.s32 %s193, %s191
      %s195 = smul.addr %s194, 8
      %s196 = scalar_lea.vmem %s3, %s195
      %v197 = vld [vmem:[%s189] sm:$0xf]
      %v198 = vld [vmem:[%s1] sm:$0xff]
      %199 = vrot.lane.b32.xlu0 %v197, 127
      %v200 = vpop.permute.xlu0 %199
      %s201 = scalar_lea.vmem %s1, 8
      %v202 = vld [vmem:[%s201] sm:$0xff]
      %vm203 = vcmask 31744
      %v205 = vsel %vm203, %v202, 0
      %vm207 = vcmask 1043456
      %v209 = vsel %vm207, %v200, 0
      %211 = vmatpush.msra.mxu0 0.0
      %212 = vmatpush.msra.mxu0 0.0
      %213 = vmatpush.msra.mxu0 0.0
      %214 = vmatpush.msra.mxu0 0.0
      %215 = vmatpush.msra.mxu0 0.0
      %216 = vmatpush.msra.mxu0 0.0
      %217 = vmatpush.msra.mxu0 0.0
      %218 = vmatpush.msra.mxu0 0.0
      %219 = vmatpush.msra.mxu0 0.0
      %220 = vmatpush.msra.mxu0 0.0
      %221 = vmatpush.msra.mxu0 0.0
      %222 = vmatpush.msra.mxu0 0.0
      %223 = vmatpush.msra.mxu0 0.0
      %224 = vmatpush.msra.mxu0 0.0
      %225 = vmatpush.msra.mxu0 0.0
      %226 = vmatpush.msra.mxu0 %v209
      %227 = vmatmul.f32.gmra.mxu0 %v205
      %v228 = vpop.f32.mrf.mxu0
      %v229 = vadd.f32 0.0, %v228
      %230 = vdwg.mxu0
      %v232 = vsel %vm203, %v198, 0
      %v235 = vsel %vm207, %v197, 0
      %237 = vmatpush.msra.mxu0 0.0
      %238 = vmatpush.msra.mxu0 0.0
      %239 = vmatpush.msra.mxu0 0.0
      %240 = vmatpush.msra.mxu0 0.0
      %241 = vmatpush.msra.mxu0 0.0
      %242 = vmatpush.msra.mxu0 0.0
      %243 = vmatpush.msra.mxu0 0.0
      %244 = vmatpush.msra.mxu0 0.0
      %245 = vmatpush.msra.mxu0 0.0
      %246 = vmatpush.msra.mxu0 0.0
      %247 = vmatpush.msra.mxu0 0.0
      %248 = vmatpush.msra.mxu0 0.0
      %249 = vmatpush.msra.mxu0 0.0
      %250 = vmatpush.msra.mxu0 0.0
      %251 = vmatpush.msra.mxu0 0.0
      %252 = vmatpush.msra.mxu0 %v235
      %253 = vmatmul.f32.gmra.mxu0 %v232
      %v254 = vpop.f32.mrf.mxu0
      %v255 = vadd.f32 %v229, %v254
      %256 = vdwg.mxu0
      %257 = vrot.lane.b32.xlu0 %v197, 126
      %v258 = vpop.permute.xlu0 %257
      %s259 = scalar_lea.vmem %s1, 16
      %v260 = vld [vmem:[%s259] sm:$0xff]
      %v262 = vsel %vm203, %v260, 0
      %v265 = vsel %vm207, %v258, 0
      %267 = vmatpush.msra.mxu0 0.0
      %268 = vmatpush.msra.mxu0 0.0
      %269 = vmatpush.msra.mxu0 0.0
      %270 = vmatpush.msra.mxu0 0.0
      %271 = vmatpush.msra.mxu0 0.0
      %272 = vmatpush.msra.mxu0 0.0
      %273 = vmatpush.msra.mxu0 0.0
      %274 = vmatpush.msra.mxu0 0.0
      %275 = vmatpush.msra.mxu0 0.0
      %276 = vmatpush.msra.mxu0 0.0
      %277 = vmatpush.msra.mxu0 0.0
      %278 = vmatpush.msra.mxu0 0.0
      %279 = vmatpush.msra.mxu0 0.0
      %280 = vmatpush.msra.mxu0 0.0
      %281 = vmatpush.msra.mxu0 0.0
      %282 = vmatpush.msra.mxu0 %v265
      %283 = vmatmul.f32.gmra.mxu0 %v262
      %v284 = vpop.f32.mrf.mxu0
      %v285 = vadd.f32 0.0, %v284
      %286 = vdwg.mxu0
      %v287 = vadd.f32 %v255, %v285
      %v288 = vld [vmem:[%s2] sm:$0xff]
      %290 = vset.pattern.permute.xlu0 0
      %291 = vperm.xlu0 %290, %v288
      %v292 = vpop.permute.xlu0 %291
      %v294 = vadd.f32 %v287, %v292
      %295 = vst [vmem:[%s196] sm:$0xff] %v294
      %p296 = scmp.lt.s32.totalorder %s18, 1
      %s297 = scalar_select %p296, %s18, 1
      %p298 = scmp.lt.s32.totalorder %s19, 0
      %s299 = scalar_select %p298, %s19, 0
      %s300 = sadd.s32 %s299, %s297
      %s301 = smul.addr %s300, 8
      %s302 = scalar_lea.vmem %s3, %s301
      // Predicated region
      $region33: #{_linear_time_impl.1} parent=31 // pred_check
        %p303 = pneg %p116
      $region34: #{_linear_time_impl.1} parent=31 // pred_check_branch
        %305 = sbr.rel (%p303) target = $region36
      $region35: #{_linear_time_impl.1} parent=31 // pred_region
        _
      $region36: #{_linear_time_impl.1} parent=31 // pred_fallthru
        _
    $region32: #{_linear_time_impl.1} parent=5 // pred_fallthru
      _
    %p306 = scmp.le.s32.totalorder 2, %s9
    // Predicated region
    $region37: #{_linear_time_impl.1} parent=5 // pred_check
      %p307 = pneg %p306
    $region38: #{_linear_time_impl.1} parent=5 // pred_check_branch
      %309 = sbr.rel (%p307) target = $region40
    $region39: #{_linear_time_impl.1} parent=5 // pred_region
      %s310 = ssub.s32 %s9, 2
      // Predicated region
      $region41: #{_linear_time_impl.1} parent=39 // pred_check
        %p311 = pneg %p122
      $region42: #{_linear_time_impl.1} parent=39 // pred_check_branch
        %313 = sbr.rel (%p311) target = $region44
      $region43: #{_linear_time_impl.1} parent=39 // pred_region
        %p314 = scmp.lt.s32.totalorder %s20, 1
        %s315 = scalar_select %p314, %s20, 1
        %p316 = scmp.lt.s32.totalorder %s21, 0
        %s317 = scalar_select %p316, %s21, 0
        %s318 = sadd.s32 %s317, %s315
        %s319 = smul.addr %s318, 8
        %s320 = scalar_lea.vmem %s3, %s319
      $region44: #{_linear_time_impl.1} parent=39 // pred_fallthru
        _
    $region40: #{_linear_time_impl.1} parent=5 // pred_fallthru
      _
  $region6: #{_linear_time_impl.1} parent=0 // loop_footer
    %s13 = sadd.s32 1, %s9
  $region7: #{_linear_time_impl.1} parent=0 // loop_footer_branch
    %8 = sbr.rel target = $region3
  $region8: #{_linear_time_impl.1} parent=0 // loop_exit
    _

// kernel: _linear_time_impl.1
$region0: #{_linear_time_impl.1}
  #allocation0 [shape = 'u32[]', space=smem, size = 0x4, offset = 0x4, fixed_abs, tag = 'smem constant byte address 0x4 - core index']
  #allocation1 [shape = 'u32[72,128]{1,0:T(1,128)}', space=vmem, size = 0x9000, scoped, tag = 'internal scratch']
  %s0 = inlined_call_operand.vmem [shape: f32[2,4,128], index: 0, kind: input, shape index: {}]
  %s1 = inlined_call_operand.vmem [shape: f32[3,8,4], index: 1, kind: input, shape index: {}]
  %s2 = inlined_call_operand.vmem [shape: f32[8,1], index: 2, kind: input, shape index: {}]
  %s3 = inlined_call_operand.vmem [shape: f32[2,8,128], index: 3, kind: output, shape index: {}]
  %s4 = sld [smem:[#allocation0]]
  $region45: #{_linear_time_impl.1} parent=0
    _
  %s6 = ssub.s32 1, %s4
  %s7 = scalar_select 0, %s6, %s4
  loop: start=0, step=1, limit=4
  $region2: #{_linear_time_impl.1} parent=0 // loop_pre_header
    _
  $region3: #{_linear_time_impl.1} parent=0 // loop_header
    %s9 = sphi 0, %s13
    %p10 = scmp.ge.s32.totalorder %s9, 4
    %s16 = sphi 0, %s28
    %s17 = sphi 0, %s24
    %s18 = sphi 0, %s16
    %s19 = sphi 0, %s17
    %s20 = sphi 0, %s18
    %s21 = sphi 0, %s19
    %s33 = sphi 0, %s35
    %s36 = sphi 0, %s33
    %s37 = sphi 0, %s36
    %s53 = sphi 0, %s37
    %s57 = sphi 0, %s57
    %s59 = sphi 0, %s57
    %s60 = sphi 0, %s59
    %s74 = sphi 0, %s60
    %s78 = sphi 0, %s78
    %s80 = sphi 0, %s78
    %s81 = sphi 0, %s80
    %s95 = sphi 0, %s81
    %s103 = sphi 0, %s105
    %s106 = sphi 0, %s103
    %s107 = sphi 0, %s106
    %s123 = sphi 0, %s107
  $region4: #{_linear_time_impl.1} parent=0 // loop_header_branch
    %12 = sbr.rel (%p10) target = $region8
  $region5: #{_linear_time_impl.1} parent=0 // loop_body
    %s14 = ssub.s32 %s9, 1
    %s15 = ssub.s32 %s9, 2
    %s22 = sadd.s32 1, %s17
    %p23 = scmp.ge.s32.totalorder %s22, 1
    %s24 = scalar_select %p23, 0, %s22
    %s25 = sadd.s32 1, %s16
    %s26 = scalar_select %p23, %s25, %s16
    %p27 = scmp.ge.s32.totalorder %s26, 2
    %s28 = scalar_select %p27, 0, %s26
    %s29 = ssub.s32 %s16, %s28
    %s30 = ssub.s32 %s17, %s24
    %s31 = sor.u32 %s29, %s30
    %p32 = scmp.eq.s32.totalorder %s31, 0
    %s34 = sadd.s32 %s33, 1
    %s35 = scalar_select %p32, %s33, %s34
    %p38 = pneg %p32
    %p39 = scmp.eq.s32.totalorder %s9, 1
    %p40 = por %p38, %p39
    %p41 = scmp.ne.s32.totalorder %s33, %s36
    %p42 = scmp.eq.s32.totalorder %s9, 0
    %p43 = por %p41, %p42
    %p44 = scmp.ne.s32.totalorder %s33, %s36
    %p45 = scmp.eq.s32.totalorder %s14, 1
    %p46 = por %p44, %p45
    %p47 = scmp.ne.s32.totalorder %s36, %s37
    %p48 = scmp.eq.s32.totalorder %s14, 0
    %p49 = por %p47, %p48
    %p50 = scmp.ne.s32.totalorder %s36, %s37
    %p51 = scmp.eq.s32.totalorder %s15, 1
    %p52 = por %p50, %p51
    %p54 = scmp.ne.s32.totalorder %s37, %s53
    %p55 = scmp.eq.s32.totalorder %s15, 0
    %p56 = por %p54, %p55
    %s58 = sadd.s32 %s57, 1
    %p61 = scmp.eq.s32.totalorder %s9, 1
    %p62 = scmp.ne.s32.totalorder %s57, %s59
    %p63 = scmp.eq.s32.totalorder %s9, 0
    %p64 = por %p62, %p63
    %p65 = scmp.ne.s32.totalorder %s57, %s59
    %p66 = scmp.eq.s32.totalorder %s14, 1
    %p67 = por %p65, %p66
    %p68 = scmp.ne.s32.totalorder %s59, %s60
    %p69 = scmp.eq.s32.totalorder %s14, 0
    %p70 = por %p68, %p69
    %p71 = scmp.ne.s32.totalorder %s59, %s60
    %p72 = scmp.eq.s32.totalorder %s15, 1
    %p73 = por %p71, %p72
    %p75 = scmp.ne.s32.totalorder %s60, %s74
    %p76 = scmp.eq.s32.totalorder %s15, 0
    %p77 = por %p75, %p76
    %s79 = sadd.s32 %s78, 1
    %p82 = scmp.eq.s32.totalorder %s9, 1
    %p83 = scmp.ne.s32.totalorder %s78, %s80
    %p84 = scmp.eq.s32.totalorder %s9, 0
    %p85 = por %p83, %p84
    %p86 = scmp.ne.s32.totalorder %s78, %s80
    %p87 = scmp.eq.s32.totalorder %s14, 1
    %p88 = por %p86, %p87
    %p89 = scmp.ne.s32.totalorder %s80, %s81
    %p90 = scmp.eq.s32.totalorder %s14, 0
    %p91 = por %p89, %p90
    %p92 = scmp.ne.s32.totalorder %s80, %s81
    %p93 = scmp.eq.s32.totalorder %s15, 1
    %p94 = por %p92, %p93
    %p96 = scmp.ne.s32.totalorder %s81, %s95
    %p97 = scmp.eq.s32.totalorder %s15, 0
    %p98 = por %p96, %p97
    %s99 = ssub.s32 %s16, %s28
    %s100 = ssub.s32 %s17, %s24
    %s101 = sor.u32 %s99, %s100
    %p102 = scmp.eq.s32.totalorder %s101, 0
    %s104 = sadd.s32 %s103, 1
    %s105 = scalar_select %p102, %s103, %s104
    %p108 = pneg %p102
    %p109 = scmp.eq.s32.totalorder %s9, 1
    %p110 = por %p108, %p109
    %p111 = scmp.ne.s32.totalorder %s103, %s106
    %p112 = scmp.eq.s32.totalorder %s9, 0
    %p113 = por %p111, %p112
    %p114 = scmp.ne.s32.totalorder %s103, %s106
    %p115 = scmp.eq.s32.totalorder %s14, 1
    %p116 = por %p114, %p115
    %p117 = scmp.ne.s32.totalorder %s106, %s107
    %p118 = scmp.eq.s32.totalorder %s14, 0
    %p119 = por %p117, %p118
    %p120 = scmp.ne.s32.totalorder %s106, %s107
    %p121 = scmp.eq.s32.totalorder %s15, 1
    %p122 = por %p120, %p121
    %p124 = scmp.ne.s32.totalorder %s107, %s123
    %p125 = scmp.eq.s32.totalorder %s15, 0
    %p126 = por %p124, %p125
    %p127 = scmp.le.s32.totalorder 1, %s9
    %p128 = scmp.lt.s32.totalorder %s9, 3
    %p129 = pnand %p127, %p128
    %p130 = pneg %p129
    // Predicated region
    $region9: #{_linear_time_impl.1} parent=5 // pred_check
      _
    $region10: #{_linear_time_impl.1} parent=5 // pred_check_branch
      %132 = sbr.rel (%p129) target = $region12
    $region11: #{_linear_time_impl.1} parent=5 // pred_region
      %s133 = ssub.s32 %s9, 1
      // Predicated region
      $region13: #{_linear_time_impl.1} parent=11 // pred_check
        %p134 = pneg %p70
      $region14: #{_linear_time_impl.1} parent=11 // pred_check_branch
        %136 = sbr.rel (%p134) target = $region16
      $region15: #{_linear_time_impl.1} parent=11 // pred_region
        _
      $region16: #{_linear_time_impl.1} parent=11 // pred_fallthru
        _
      // Predicated region
      $region17: #{_linear_time_impl.1} parent=11 // pred_check
        %p137 = pneg %p91
      $region18: #{_linear_time_impl.1} parent=11 // pred_check_branch
        %139 = sbr.rel (%p137) target = $region20
      $region19: #{_linear_time_impl.1} parent=11 // pred_region
        _
      $region20: #{_linear_time_impl.1} parent=11 // pred_fallthru
        _
    $region12: #{_linear_time_impl.1} parent=5 // pred_fallthru
      _
    %p140 = scmp.lt.s32.totalorder %s9, 2
    // Predicated region
    $region21: #{_linear_time_impl.1} parent=5 // pred_check
      %p141 = pneg %p140
    $region22: #{_linear_time_impl.1} parent=5 // pred_check_branch
      %143 = sbr.rel (%p141) target = $region24
    $region23: #{_linear_time_impl.1} parent=5 // pred_region
      // Predicated region
      $region25: #{_linear_time_impl.1} parent=23 // pred_check
        %p144 = pneg %p43
      $region26: #{_linear_time_impl.1} parent=23 // pred_check_branch
        %146 = sbr.rel (%p144) target = $region28
      $region27: #{_linear_time_impl.1} parent=23 // pred_region
        %p147 = scmp.lt.s32.totalorder %s16, 1
        %s148 = scalar_select %p147, %s16, 1
        %p149 = scmp.lt.s32.totalorder %s17, 0
        %s150 = scalar_select %p149, %s17, 0
        %s151 = sadd.s32 %s150, %s148
        %s152 = smul.addr %s151, 4
        %s153 = scalar_lea.vmem %s0, %s152
      $region28: #{_linear_time_impl.1} parent=23 // pred_fallthru
        _
    $region24: #{_linear_time_impl.1} parent=5 // pred_fallthru
      _
    %p154 = scmp.le.s32.totalorder 1, %s9
    %p155 = scmp.lt.s32.totalorder %s9, 3
    %p156 = pnand %p154, %p155
    %p157 = pneg %p156
    // Predicated region
    $region29: #{_linear_time_impl.1} parent=5 // pred_check
      _
    $region30: #{_linear_time_impl.1} parent=5 // pred_check_branch
      %159 = sbr.rel (%p156) target = $region32
    $region31: #{_linear_time_impl.1} parent=5 // pred_region
      %s160 = ssub.s32 %s9, 1
      %p161 = scmp.lt.s32.totalorder %s18, 1
      %s162 = scalar_select %p161, %s18, 1
      %p163 = scmp.lt.s32.totalorder %s19, 0
      %s164 = scalar_select %p163, %s19, 0
      %s165 = sadd.s32 %s164, %s162
      %s166 = smul.addr %s165, 4
      %s167 = scalar_lea.vmem %s0, %s166
      %p168 = pneg %p49
      %p169 = pneg %p46
      %p170 = pneg %p70
      %p171 = pneg %p67
      %p172 = pneg %p91
      %p173 = pneg %p88
      %p174 = pneg %p119
      %p175 = pneg %p116
      %p176 = scmp.lt.s32.totalorder %s18, 1
      %s177 = scalar_select %p176, %s18, 1
      %p178 = scmp.lt.s32.totalorder %s19, 0
      %s179 = scalar_select %p178, %s19, 0
      %s180 = sadd.s32 %s179, %s177
      %s181 = smul.addr %s180, 8
      %s182 = scalar_lea.vmem %s3, %s181
      %p183 = scmp.lt.s32.totalorder %s18, 1
      %s184 = scalar_select %p183, %s18, 1
      %p185 = scmp.lt.s32.totalorder %s19, 0
      %s186 = scalar_select %p185, %s19, 0
      %s187 = sadd.s32 %s186, %s184
      %s188 = smul.addr %s187, 4
      %s189 = scalar_lea.vmem %s0, %s188
      %p190 = scmp.lt.s32.totalorder %s18, 1
      %s191 = scalar_select %p190, %s18, 1
      %p192 = scmp.lt.s32.totalorder %s19, 0
      %s193 = scalar_select %p192, %s19, 0
      %s194 = sadd.s32 %s193, %s191
      %s195 = smul.addr %s194, 8
      %s196 = scalar_lea.vmem %s3, %s195
      %v197 = vld [vmem:[%s189] sm:$0xf]
      %v198 = vld [vmem:[%s1] sm:$0xff]
      %199 = vrot.lane.b32.xlu0 %v197, 127
      %v200 = vpop.permute.xlu0 %199
      %s201 = scalar_lea.vmem %s1, 8
      %v202 = vld [vmem:[%s201] sm:$0xff]
      %vm203 = vcmask 31744
      %v205 = vsel %vm203, %v202, 0
      %vm207 = vcmask 1043456
      %v209 = vsel %vm207, %v200, 0
      %211 = vmatpush.msra.mxu0 0.0
      %212 = vmatpush.msra.mxu0 0.0
      %213 = vmatpush.msra.mxu0 0.0
      %214 = vmatpush.msra.mxu0 0.0
      %215 = vmatpush.msra.mxu0 0.0
      %216 = vmatpush.msra.mxu0 0.0
      %217 = vmatpush.msra.mxu0 0.0
      %218 = vmatpush.msra.mxu0 0.0
      %219 = vmatpush.msra.mxu0 0.0
      %220 = vmatpush.msra.mxu0 0.0
      %221 = vmatpush.msra.mxu0 0.0
      %222 = vmatpush.msra.mxu0 0.0
      %223 = vmatpush.msra.mxu0 0.0
      %224 = vmatpush.msra.mxu0 0.0
      %225 = vmatpush.msra.mxu0 0.0
      %226 = vmatpush.msra.mxu0 %v209
      %227 = vmatmul.f32.gmra.mxu0 %v205
      %v228 = vpop.f32.mrf.mxu0
      %v229 = vadd.f32 0.0, %v228
      %230 = vdwg.mxu0
      %v232 = vsel %vm203, %v198, 0
      %v235 = vsel %vm207, %v197, 0
      %237 = vmatpush.msra.mxu0 0.0
      %238 = vmatpush.msra.mxu0 0.0
      %239 = vmatpush.msra.mxu0 0.0
      %240 = vmatpush.msra.mxu0 0.0
      %241 = vmatpush.msra.mxu0 0.0
      %242 = vmatpush.msra.mxu0 0.0
      %243 = vmatpush.msra.mxu0 0.0
      %244 = vmatpush.msra.mxu0 0.0
      %245 = vmatpush.msra.mxu0 0.0
      %246 = vmatpush.msra.mxu0 0.0
      %247 = vmatpush.msra.mxu0 0.0
      %248 = vmatpush.msra.mxu0 0.0
      %249 = vmatpush.msra.mxu0 0.0
      %250 = vmatpush.msra.mxu0 0.0
      %251 = vmatpush.msra.mxu0 0.0
      %252 = vmatpush.msra.mxu0 %v235
      %253 = vmatmul.f32.gmra.mxu0 %v232
      %v254 = vpop.f32.mrf.mxu0
      %v255 = vadd.f32 %v229, %v254
      %256 = vdwg.mxu0
      %257 = vrot.lane.b32.xlu0 %v197, 126
      %v258 = vpop.permute.xlu0 %257
      %s259 = scalar_lea.vmem %s1, 16
      %v260 = vld [vmem:[%s259] sm:$0xff]
      %v262 = vsel %vm203, %v260, 0
      %v265 = vsel %vm207, %v258, 0
      %267 = vmatpush.msra.mxu0 0.0
      %268 = vmatpush.msra.mxu0 0.0
      %269 = vmatpush.msra.mxu0 0.0
      %270 = vmatpush.msra.mxu0 0.0
      %271 = vmatpush.msra.mxu0 0.0
      %272 = vmatpush.msra.mxu0 0.0
      %273 = vmatpush.msra.mxu0 0.0
      %274 = vmatpush.msra.mxu0 0.0
      %275 = vmatpush.msra.mxu0 0.0
      %276 = vmatpush.msra.mxu0 0.0
      %277 = vmatpush.msra.mxu0 0.0
      %278 = vmatpush.msra.mxu0 0.0
      %279 = vmatpush.msra.mxu0 0.0
      %280 = vmatpush.msra.mxu0 0.0
      %281 = vmatpush.msra.mxu0 0.0
      %282 = vmatpush.msra.mxu0 %v265
      %283 = vmatmul.f32.gmra.mxu0 %v262
      %v284 = vpop.f32.mrf.mxu0
      %v285 = vadd.f32 0.0, %v284
      %286 = vdwg.mxu0
      %v287 = vadd.f32 %v255, %v285
      %v288 = vld [vmem:[%s2] sm:$0xff]
      %290 = vset.pattern.permute.xlu0 0
      %291 = vperm.xlu0 %290, %v288
      %v292 = vpop.permute.xlu0 %291
      %v294 = vadd.f32 %v287, %v292
      %295 = vst [vmem:[%s196] sm:$0xff] %v294
      %p296 = scmp.lt.s32.totalorder %s18, 1
      %s297 = scalar_select %p296, %s18, 1
      %p298 = scmp.lt.s32.totalorder %s19, 0
      %s299 = scalar_select %p298, %s19, 0
      %s300 = sadd.s32 %s299, %s297
      %s301 = smul.addr %s300, 8
      %s302 = scalar_lea.vmem %s3, %s301
      // Predicated region
      $region33: #{_linear_time_impl.1} parent=31 // pred_check
        %p303 = pneg %p116
      $region34: #{_linear_time_impl.1} parent=31 // pred_check_branch
        %305 = sbr.rel (%p303) target = $region36
      $region35: #{_linear_time_impl.1} parent=31 // pred_region
        _
      $region36: #{_linear_time_impl.1} parent=31 // pred_fallthru
        _
    $region32: #{_linear_time_impl.1} parent=5 // pred_fallthru
      _
    %p306 = scmp.le.s32.totalorder 2, %s9
    // Predicated region
    $region37: #{_linear_time_impl.1} parent=5 // pred_check
      %p307 = pneg %p306
    $region38: #{_linear_time_impl.1} parent=5 // pred_check_branch
      %309 = sbr.rel (%p307) target = $region40
    $region39: #{_linear_time_impl.1} parent=5 // pred_region
      %s310 = ssub.s32 %s9, 2
      // Predicated region
      $region41: #{_linear_time_impl.1} parent=39 // pred_check
        %p311 = pneg %p122
      $region42: #{_linear_time_impl.1} parent=39 // pred_check_branch
        %313 = sbr.rel (%p311) target = $region44
      $region43: #{_linear_time_impl.1} parent=39 // pred_region
        %p314 = scmp.lt.s32.totalorder %s20, 1
        %s315 = scalar_select %p314, %s20, 1
        %p316 = scmp.lt.s32.totalorder %s21, 0
        %s317 = scalar_select %p316, %s21, 0
        %s318 = sadd.s32 %s317, %s315
        %s319 = smul.addr %s318, 8
        %s320 = scalar_lea.vmem %s3, %s319
      $region44: #{_linear_time_impl.1} parent=39 // pred_fallthru
        _
    $region40: #{_linear_time_impl.1} parent=5 // pred_fallthru
      _
  $region6: #{_linear_time_impl.1} parent=0 // loop_footer
    %s13 = sadd.s32 1, %s9
  $region7: #{_linear_time_impl.1} parent=0 // loop_footer_branch
    %8 = sbr.rel target = $region3
  $region8: #{_linear_time_impl.1} parent=0 // loop_exit
    _

</llo_original>
